<compile_context>
chip_gen: v5e
topology: v5e:2x2
jax: 0.10.0
libtpu: 0.0.40
codegen_flags: <defaults>
</compile_context>

<pallas_src>
import jax
import jax.numpy as jnp
from jax.experimental import pallas as pl
from jax.experimental.pallas import tpu as pltpu

P = 128                       # lane-dense padded feature width
_CARRIER = P - 1              # column carrying the constant-1 bias channel
_DIMS = [(8, 16), (16, 32), (32, 64), (64, 8)]   # (in, out) per layer
_IN0 = _DIMS[0][0]


def _mlp_kernel(x_ref, w_ref, b0_ref, o_ref):
    """Fused 4x (Linear + ReLU).

    x_ref : (bpad, 8)  raw input (no feature padding needed)
    w_ref : (4, 128, 128) packed weight slabs
    b0_ref: (1, 128)   layer-1 bias row; column 127 == 1 seeds the carrier
    o_ref : (bpad, 128) lane-dense output (real result in columns 0..7)
    """
    # Layer 1: dot over only the 8 real weight rows, then broadcast-add the
    # bias/carrier row.  Padded columns stay exactly 0, carrier column -> 1.
    h = jnp.dot(x_ref[...], w_ref[0, :_IN0, :],
                preferred_element_type=jnp.float32)
    h = jnp.maximum(h + b0_ref[...], 0.0)
    # Layers 2-4: biases are picked up from row 127 of each slab via the
    # constant-1 carrier column; carrier is re-emitted by slab[127,127]=1.
    h = jnp.maximum(
        jnp.dot(h, w_ref[1], preferred_element_type=jnp.float32), 0.0)
    h = jnp.maximum(
        jnp.dot(h, w_ref[2], preferred_element_type=jnp.float32), 0.0)
    o_ref[...] = jnp.maximum(
        jnp.dot(h, w_ref[3], preferred_element_type=jnp.float32), 0.0)


def pack_params(params):
    """Pack weights/biases into (4,128,128) slabs + a (1,128) layer-1 bias row.

    Slab i layout (stored (in, out): y = x @ W + b):
      [:in_i, :out_i] = W_i
      [127,  :out_i]  = b_i      (i >= 1; picked up by the constant-1 carrier)
      [127,  127]     = 1.0      (1 <= i < 3; re-emits the carrier)
    Layer-1 bias lives in the separate b0 row: b0[0,:16]=b1, b0[0,127]=1.
    """
    for fi, fo in _DIMS:
        assert fi < P and fo < P, "feature dim would collide with carrier column"
    slabs = []
    for i, (fi, fo) in enumerate(_DIMS):
        w = jnp.zeros((P, P), jnp.float32)
        w = w.at[:fi, :fo].set(params[f"w{i + 1}"])
        if i > 0:
            w = w.at[_CARRIER, :fo].set(params[f"b{i + 1}"].reshape(-1))
            if i < len(_DIMS) - 1:
                w = w.at[_CARRIER, _CARRIER].set(1.0)
        slabs.append(w)
    w_pack = jnp.stack(slabs)

    b0 = jnp.zeros((1, P), jnp.float32)
    b0 = b0.at[0, :_DIMS[0][1]].set(params["b1"].reshape(-1))
    b0 = b0.at[0, _CARRIER].set(1.0)
    return w_pack, b0


@jax.jit
def dummy_model_forward(x, w_pack, b0):
    """x: (batch, 8) f32; w_pack: (4,128,128); b0: (1,128). Returns (batch, 8)."""
    batch, _ = x.shape
    out_features = _DIMS[-1][1]
    bpad = max(8, ((batch + 7) // 8) * 8)          # sublane-aligned batch (f32: 8)
    if bpad != batch:
        x = jnp.pad(x, ((0, bpad - batch), (0, 0)))

    flops = 2 * bpad * (_IN0 * P + 3 * P * P)
    bytes_accessed = 4 * (bpad * _IN0 + w_pack.size + b0.size + bpad * P)

    vmem = pl.BlockSpec(memory_space=pltpu.VMEM)
    out = pl.pallas_call(
        _mlp_kernel,
        out_shape=jax.ShapeDtypeStruct((bpad, P), jnp.float32),
        in_specs=[vmem, vmem, vmem],
        out_specs=vmem,
        cost_estimate=pl.CostEstimate(
            flops=flops, transcendentals=0, bytes_accessed=bytes_accessed),
    )(x, w_pack, b0)
    return out[:batch, :out_features]


def init_params(key):
    """Deterministic params matching nn.Linear shapes (weights stored (in, out)).

    Uses uniform(-1/sqrt(fan_in), 1/sqrt(fan_in)) like PyTorch's default init.
    """
    params = {}
    keys = jax.random.split(key, 2 * len(_DIMS))
    for i, (fan_in, fan_out) in enumerate(_DIMS):
        bound = 1.0 / (fan_in ** 0.5)
        params[f"w{i + 1}"] = jax.random.uniform(
            keys[2 * i], (fan_in, fan_out), jnp.float32, -bound, bound)
        params[f"b{i + 1}"] = jax.random.uniform(
            keys[2 * i + 1], (fan_out,), jnp.float32, -bound, bound)
    return params


def reference_forward(x, params):
    h = x
    for i in range(1, 5):
        h = jnp.maximum(jnp.dot(h, params[f"w{i}"]) + params[f"b{i}"], 0.0)
    return h


if __name__ == "__main__":
    key = jax.random.PRNGKey(0)
    pkey, xkey = jax.random.split(key)
    params = init_params(pkey)
    w_pack, b0 = pack_params(params)

    # Matches TestDummyModel.get_input(): torch.rand(8, 8) -> uniform [0, 1)
    x = jax.random.uniform(xkey, (8, 8), jnp.float32)

    out = dummy_model_forward(x, w_pack, b0)
    jax.block_until_ready(out)

    ref = reference_forward(x, params)
    assert out.shape == (8, 8)
    assert jnp.allclose(out, ref, atol=1e-5, rtol=1e-5)

    print("KERNEL_OK")
</pallas_src>

<mosaic_0001>
module attributes {stable_mosaic.version = 11 : i64} {
  func.func @_mlp_kernel(%arg0: memref<8x8xf32, #tpu.memory_space<vmem>>, %arg1: memref<4x128x128xf32, #tpu.memory_space<vmem>>, %arg2: memref<1x128xf32, #tpu.memory_space<vmem>>, %arg3: memref<8x128xf32, #tpu.memory_space<vmem>>) attributes {dimension_semantics = [], scalar_prefetch = 0 : i64, scratch_operands = 0 : i64, tpu.core_type = #tpu.core_type<tc>} {
    %c0 = arith.constant 0 : index
    %c0_0 = arith.constant 0 : index
    %0 = vector.load %arg0[%c0, %c0_0] : memref<8x8xf32, #tpu.memory_space<vmem>>, vector<8x8xf32>
    %c0_1 = arith.constant 0 : index
    %c0_2 = arith.constant 0 : index
    %c0_3 = arith.constant 0 : index
    %1 = vector.load %arg1[%c0_1, %c0_2, %c0_3] : memref<4x128x128xf32, #tpu.memory_space<vmem>>, vector<1x8x128xf32>
    %2 = vector.shape_cast %1 : vector<1x8x128xf32> to vector<8x128xf32>
    %cst = arith.constant dense<0.000000e+00> : vector<8x128xf32>
    %3 = tpu.matmul %0, %2, %cst {dimension_numbers = #tpu.dot_dimension_numbers<[1], [0], [0], [1], [0, 0, 1, 1], [], []>} : vector<8x8xf32>, vector<8x128xf32>, vector<8x128xf32> -> vector<8x128xf32>
    %c0_4 = arith.constant 0 : index
    %c0_5 = arith.constant 0 : index
    %4 = vector.load %arg2[%c0_4, %c0_5] : memref<1x128xf32, #tpu.memory_space<vmem>>, vector<1x128xf32>
    %5 = vector.broadcast %4 : vector<1x128xf32> to vector<8x128xf32>
    %6 = arith.addf %3, %5 : vector<8x128xf32>
    %cst_6 = arith.constant 0.000000e+00 : f32
    %7 = vector.broadcast %cst_6 : f32 to vector<8x128xf32>
    %8 = arith.maximumf %6, %7 : vector<8x128xf32>
    %c1 = arith.constant 1 : index
    %c0_7 = arith.constant 0 : index
    %c0_8 = arith.constant 0 : index
    %9 = vector.load %arg1[%c1, %c0_7, %c0_8] : memref<4x128x128xf32, #tpu.memory_space<vmem>>, vector<1x128x128xf32>
    %10 = vector.shape_cast %9 : vector<1x128x128xf32> to vector<128x128xf32>
    %cst_9 = arith.constant dense<0.000000e+00> : vector<8x128xf32>
    %11 = tpu.matmul %8, %10, %cst_9 {dimension_numbers = #tpu.dot_dimension_numbers<[1], [0], [0], [1], [0, 0, 1, 1], [], []>} : vector<8x128xf32>, vector<128x128xf32>, vector<8x128xf32> -> vector<8x128xf32>
    %cst_10 = arith.constant 0.000000e+00 : f32
    %12 = vector.broadcast %cst_10 : f32 to vector<8x128xf32>
    %13 = arith.maximumf %11, %12 : vector<8x128xf32>
    %c2 = arith.constant 2 : index
    %c0_11 = arith.constant 0 : index
    %c0_12 = arith.constant 0 : index
    %14 = vector.load %arg1[%c2, %c0_11, %c0_12] : memref<4x128x128xf32, #tpu.memory_space<vmem>>, vector<1x128x128xf32>
    %15 = vector.shape_cast %14 : vector<1x128x128xf32> to vector<128x128xf32>
    %cst_13 = arith.constant dense<0.000000e+00> : vector<8x128xf32>
    %16 = tpu.matmul %13, %15, %cst_13 {dimension_numbers = #tpu.dot_dimension_numbers<[1], [0], [0], [1], [0, 0, 1, 1], [], []>} : vector<8x128xf32>, vector<128x128xf32>, vector<8x128xf32> -> vector<8x128xf32>
    %cst_14 = arith.constant 0.000000e+00 : f32
    %17 = vector.broadcast %cst_14 : f32 to vector<8x128xf32>
    %18 = arith.maximumf %16, %17 : vector<8x128xf32>
    %c3 = arith.constant 3 : index
    %c0_15 = arith.constant 0 : index
    %c0_16 = arith.constant 0 : index
    %19 = vector.load %arg1[%c3, %c0_15, %c0_16] : memref<4x128x128xf32, #tpu.memory_space<vmem>>, vector<1x128x128xf32>
    %20 = vector.shape_cast %19 : vector<1x128x128xf32> to vector<128x128xf32>
    %cst_17 = arith.constant dense<0.000000e+00> : vector<8x128xf32>
    %21 = tpu.matmul %18, %20, %cst_17 {dimension_numbers = #tpu.dot_dimension_numbers<[1], [0], [0], [1], [0, 0, 1, 1], [], []>} : vector<8x128xf32>, vector<128x128xf32>, vector<8x128xf32> -> vector<8x128xf32>
    %cst_18 = arith.constant 0.000000e+00 : f32
    %22 = vector.broadcast %cst_18 : f32 to vector<8x128xf32>
    %23 = arith.maximumf %21, %22 : vector<8x128xf32>
    %c0_19 = arith.constant 0 : index
    %c0_20 = arith.constant 0 : index
    %24 = vector.load %arg3[%c0_19, %c0_20] : memref<8x128xf32, #tpu.memory_space<vmem>>, vector<8x128xf32>
    tpu.vector_store %arg3[%c0_19, %c0_20], %23 {strides = array<i32>} : memref<8x128xf32, #tpu.memory_space<vmem>>, vector<8x128xf32>,
    return
  }
}

</mosaic_0001>

<llo_original>
// kernel: dummy_model_forward.1
$region0: #{dummy_model_forward.1}
  #allocation0 [shape = 'u32[]', space=smem, size = 0x4, offset = 0x4, fixed_abs, tag = 'smem constant byte address 0x4 - core index']
  #allocation1 [shape = 'u32[72,128]{1,0:T(1,128)}', space=vmem, size = 0x9000, scoped, tag = 'internal scratch']
  %s0 = inlined_call_operand.hbm [shape: f32[8,8], index: 0, kind: input, shape index: {}]
  %s1 = inlined_call_operand.hbm [shape: f32[4,128,128], index: 1, kind: input, shape index: {}]
  %s2 = inlined_call_operand.vmem [shape: f32[1,128], index: 2, kind: input, shape index: {}]
  %s3 = inlined_call_operand.hbm [shape: f32[8,128], index: 3, kind: output, shape index: {}]
  %s4 = sld [smem:[#allocation0]]
  $region30: #{dummy_model_forward.1} parent=0
    _
  %s6 = ssub.s32 1, %s4
  %s7 = scalar_select 0, %s6, %s4
  $region1: #{dummy_model_forward.1} parent=0
    #allocation2 [shape = 'u8[4096]{0}', space=vmem, size = 0x1000, scoped, tag = 'input window, operand 0, single buffered']
    #allocation3 [shape = 's32[1]{0}', space=sflag, size = 0x4, scoped, tag = 'scoped memory for dummy_model_forward.1']
    #allocation4 [shape = 's32[1]{0}', space=sflag, size = 0x4, scoped, tag = 'scoped memory for dummy_model_forward.1']
    #allocation5 [shape = 'u8[262144]{0}', space=vmem, size = 0x40000, scoped, tag = 'input window, operand 1, single buffered']
    #allocation6 [shape = 's32[1]{0}', space=sflag, size = 0x4, scoped, tag = 'scoped memory for dummy_model_forward.1']
    #allocation7 [shape = 'u8[4096]{0}', space=vmem, size = 0x1000, scoped, tag = 'output window, operand 0, single buffered']
    %8 = vsyncpa [#allocation3], 0
    %9 = vsyncpa [#allocation6], 0
    %10 = vsyncpa [#allocation4], 0
    // Predicated region
    $region2: #{dummy_model_forward.1} parent=1 // pred_check
      _
    $region3: #{dummy_model_forward.1} parent=1 // pred_check_branch
      %12 = sbr.rel (0) target = $region5
    $region4: #{dummy_model_forward.1} parent=1 // pred_region
      %14 = vsyncadd [#allocation3], 0
      %s16 = sshll.u32 %s0, 4
      %s17 = int_to_ptr.hbm [resolvable:$true] %s16
      %s18 = sshll.u32 [#allocation2], 4
      %s19 = int_to_ptr.vmem [resolvable:$true] %s18
      %21 = dma.hbm_to_vmem [thread:$0]  %s17, 128, %s19, [#allocation3]
    $region5: #{dummy_model_forward.1} parent=1 // pred_fallthru
      _
    // Predicated region
    $region6: #{dummy_model_forward.1} parent=1 // pred_check
      _
    $region7: #{dummy_model_forward.1} parent=1 // pred_check_branch
      %23 = sbr.rel (0) target = $region9
    $region8: #{dummy_model_forward.1} parent=1 // pred_region
      %25 = vsyncadd [#allocation6], 0
      %s26 = sshll.u32 %s1, 4
      %s27 = int_to_ptr.hbm [resolvable:$true] %s26
      %s28 = sshll.u32 [#allocation5], 4
      %s29 = int_to_ptr.vmem [resolvable:$true] %s28
      %34 = dma.hbm_to_vmem [thread:$0]  %s27, 8192, %s29, [#allocation6], 128, 128, 8
    $region9: #{dummy_model_forward.1} parent=1 // pred_fallthru
      _
    // Predicated region
    $region10: #{dummy_model_forward.1} parent=1 // pred_check
      _
    $region11: #{dummy_model_forward.1} parent=1 // pred_check_branch
      %36 = sbr.rel (0) target = $region13
    $region12: #{dummy_model_forward.1} parent=1 // pred_region
      _
    $region13: #{dummy_model_forward.1} parent=1 // pred_fallthru
      _
    // Predicated region
    $region14: #{dummy_model_forward.1} parent=1 // pred_check
      _
    $region15: #{dummy_model_forward.1} parent=1 // pred_check_branch
      %38 = sbr.rel (0) target = $region17
    $region16: #{dummy_model_forward.1} parent=1 // pred_region
      %40 = dma.done [#allocation3], 128
    $region17: #{dummy_model_forward.1} parent=1 // pred_fallthru
      _
    // Predicated region
    $region18: #{dummy_model_forward.1} parent=1 // pred_check
      _
    $region19: #{dummy_model_forward.1} parent=1 // pred_check_branch
      %42 = sbr.rel (0) target = $region21
    $region20: #{dummy_model_forward.1} parent=1 // pred_region
      %44 = dma.done [#allocation6], 8192
    $region21: #{dummy_model_forward.1} parent=1 // pred_fallthru
      _
    %v45 = vld [vmem:[#allocation2] sm:$0xff]
    %v46 = vld [vmem:[#allocation5] sm:$0xff]
    %v47 = vld [vmem:[%s2] sm:$0x1]
    %v49 = vperm.slane %v47, 0
    %vm51 = vcmask 64512
    %v53 = vsel %vm51, %v45, 0
    %55 = vmatpush.msra.mxu0 0.0
    %56 = vmatpush.msra.mxu0 0.0
    %57 = vmatpush.msra.mxu0 0.0
    %58 = vmatpush.msra.mxu0 0.0
    %59 = vmatpush.msra.mxu0 0.0
    %60 = vmatpush.msra.mxu0 0.0
    %61 = vmatpush.msra.mxu0 0.0
    %62 = vmatpush.msra.mxu0 0.0
    %63 = vmatpush.msra.mxu0 0.0
    %64 = vmatpush.msra.mxu0 0.0
    %65 = vmatpush.msra.mxu0 0.0
    %66 = vmatpush.msra.mxu0 0.0
    %67 = vmatpush.msra.mxu0 0.0
    %68 = vmatpush.msra.mxu0 0.0
    %69 = vmatpush.msra.mxu0 0.0
    %70 = vmatpush.msra.mxu0 %v46
    %71 = vmatmul.f32.gmra.mxu0 %v53
    %v72 = vpop.f32.mrf.mxu0
    %v73 = vadd.f32 %v49, %v72
    %74 = vdwg.mxu0
    %v75 = vmax.f32 %v73, 0.0
    %s76 = scalar_lea.vmem [#allocation5], 128
    %v77 = vld [vmem:[%s76] sm:$0xff]
    %v78 = vld [vmem:[%s76 + $0x8] sm:$0xff]
    %v79 = vld [vmem:[%s76 + $0x10] sm:$0xff]
    %v80 = vld [vmem:[%s76 + $0x18] sm:$0xff]
    %v81 = vld [vmem:[%s76 + $0x20] sm:$0xff]
    %v82 = vld [vmem:[%s76 + $0x28] sm:$0xff]
    %v83 = vld [vmem:[%s76 + $0x30] sm:$0xff]
    %v84 = vld [vmem:[%s76 + $0x38] sm:$0xff]
    %v85 = vld [vmem:[%s76 + $0x40] sm:$0xff]
    %v86 = vld [vmem:[%s76 + $0x48] sm:$0xff]
    %v87 = vld [vmem:[%s76 + $0x50] sm:$0xff]
    %v88 = vld [vmem:[%s76 + $0x58] sm:$0xff]
    %v89 = vld [vmem:[%s76 + $0x60] sm:$0xff]
    %v90 = vld [vmem:[%s76 + $0x68] sm:$0xff]
    %v91 = vld [vmem:[%s76 + $0x70] sm:$0xff]
    %v92 = vld [vmem:[%s76 + $0x78] sm:$0xff]
    %93 = vmatpush.msra.mxu0 %v92
    %94 = vmatpush.msra.mxu0 %v91
    %95 = vmatpush.msra.mxu0 %v90
    %96 = vmatpush.msra.mxu0 %v89
    %97 = vmatpush.msra.mxu0 %v88
    %98 = vmatpush.msra.mxu0 %v87
    %99 = vmatpush.msra.mxu0 %v86
    %100 = vmatpush.msra.mxu0 %v85
    %101 = vmatpush.msra.mxu0 %v84
    %102 = vmatpush.msra.mxu0 %v83
    %103 = vmatpush.msra.mxu0 %v82
    %104 = vmatpush.msra.mxu0 %v81
    %105 = vmatpush.msra.mxu0 %v80
    %106 = vmatpush.msra.mxu0 %v79
    %107 = vmatpush.msra.mxu0 %v78
    %108 = vmatpush.msra.mxu0 %v77
    %109 = vmatmul.f32.gmra.mxu0 %v75
    %v110 = vpop.f32.mrf.mxu0
    %v111 = vadd.f32 0.0, %v110
    %112 = vdwg.mxu0
    %v113 = vmax.f32 %v111, 0.0
    %s114 = scalar_lea.vmem [#allocation5], 256
    %v115 = vld [vmem:[%s114] sm:$0xff]
    %v116 = vld [vmem:[%s114 + $0x8] sm:$0xff]
    %v117 = vld [vmem:[%s114 + $0x10] sm:$0xff]
    %v118 = vld [vmem:[%s114 + $0x18] sm:$0xff]
    %v119 = vld [vmem:[%s114 + $0x20] sm:$0xff]
    %v120 = vld [vmem:[%s114 + $0x28] sm:$0xff]
    %v121 = vld [vmem:[%s114 + $0x30] sm:$0xff]
    %v122 = vld [vmem:[%s114 + $0x38] sm:$0xff]
    %v123 = vld [vmem:[%s114 + $0x40] sm:$0xff]
    %v124 = vld [vmem:[%s114 + $0x48] sm:$0xff]
    %v125 = vld [vmem:[%s114 + $0x50] sm:$0xff]
    %v126 = vld [vmem:[%s114 + $0x58] sm:$0xff]
    %v127 = vld [vmem:[%s114 + $0x60] sm:$0xff]
    %v128 = vld [vmem:[%s114 + $0x68] sm:$0xff]
    %v129 = vld [vmem:[%s114 + $0x70] sm:$0xff]
    %v130 = vld [vmem:[%s114 + $0x78] sm:$0xff]
    %131 = vmatpush.msra.mxu0 %v130
    %132 = vmatpush.msra.mxu0 %v129
    %133 = vmatpush.msra.mxu0 %v128
    %134 = vmatpush.msra.mxu0 %v127
    %135 = vmatpush.msra.mxu0 %v126
    %136 = vmatpush.msra.mxu0 %v125
    %137 = vmatpush.msra.mxu0 %v124
    %138 = vmatpush.msra.mxu0 %v123
    %139 = vmatpush.msra.mxu0 %v122
    %140 = vmatpush.msra.mxu0 %v121
    %141 = vmatpush.msra.mxu0 %v120
    %142 = vmatpush.msra.mxu0 %v119
    %143 = vmatpush.msra.mxu0 %v118
    %144 = vmatpush.msra.mxu0 %v117
    %145 = vmatpush.msra.mxu0 %v116
    %146 = vmatpush.msra.mxu0 %v115
    %147 = vmatmul.f32.gmra.mxu0 %v113
    %v148 = vpop.f32.mrf.mxu0
    %v149 = vadd.f32 0.0, %v148
    %150 = vdwg.mxu0
    %v151 = vmax.f32 %v149, 0.0
    %s152 = scalar_lea.vmem [#allocation5], 384
    %v153 = vld [vmem:[%s152] sm:$0xff]
    %v154 = vld [vmem:[%s152 + $0x8] sm:$0xff]
    %v155 = vld [vmem:[%s152 + $0x10] sm:$0xff]
    %v156 = vld [vmem:[%s152 + $0x18] sm:$0xff]
    %v157 = vld [vmem:[%s152 + $0x20] sm:$0xff]
    %v158 = vld [vmem:[%s152 + $0x28] sm:$0xff]
    %v159 = vld [vmem:[%s152 + $0x30] sm:$0xff]
    %v160 = vld [vmem:[%s152 + $0x38] sm:$0xff]
    %v161 = vld [vmem:[%s152 + $0x40] sm:$0xff]
    %v162 = vld [vmem:[%s152 + $0x48] sm:$0xff]
    %v163 = vld [vmem:[%s152 + $0x50] sm:$0xff]
    %v164 = vld [vmem:[%s152 + $0x58] sm:$0xff]
    %v165 = vld [vmem:[%s152 + $0x60] sm:$0xff]
    %v166 = vld [vmem:[%s152 + $0x68] sm:$0xff]
    %v167 = vld [vmem:[%s152 + $0x70] sm:$0xff]
    %v168 = vld [vmem:[%s152 + $0x78] sm:$0xff]
    %169 = vmatpush.msra.mxu0 %v168
    %170 = vmatpush.msra.mxu0 %v167
    %171 = vmatpush.msra.mxu0 %v166
    %172 = vmatpush.msra.mxu0 %v165
    %173 = vmatpush.msra.mxu0 %v164
    %174 = vmatpush.msra.mxu0 %v163
    %175 = vmatpush.msra.mxu0 %v162
    %176 = vmatpush.msra.mxu0 %v161
    %177 = vmatpush.msra.mxu0 %v160
    %178 = vmatpush.msra.mxu0 %v159
    %179 = vmatpush.msra.mxu0 %v158
    %180 = vmatpush.msra.mxu0 %v157
    %181 = vmatpush.msra.mxu0 %v156
    %182 = vmatpush.msra.mxu0 %v155
    %183 = vmatpush.msra.mxu0 %v154
    %184 = vmatpush.msra.mxu0 %v153
    %185 = vmatmul.f32.gmra.mxu0 %v151
    %v186 = vpop.f32.mrf.mxu0
    %v187 = vadd.f32 0.0, %v186
    %188 = vdwg.mxu0
    %v189 = vmax.f32 %v187, 0.0
    %190 = vst [vmem:[#allocation7] sm:$0xff] %v189
    // Predicated region
    $region22: #{dummy_model_forward.1} parent=1 // pred_check
      _
    $region23: #{dummy_model_forward.1} parent=1 // pred_check_branch
      %192 = sbr.rel (0) target = $region25
    $region24: #{dummy_model_forward.1} parent=1 // pred_region
      %194 = vsyncadd [#allocation4], 0
      %s196 = sshll.u32 [#allocation7], 4
      %s197 = int_to_ptr.vmem [resolvable:$true] %s196
      %s198 = sshll.u32 %s3, 4
      %s199 = int_to_ptr.hbm [resolvable:$true] %s198
      %201 = dma.vmem_to_hbm [thread:$0]  %s197, 128, %s199, [#allocation4]
    $region25: #{dummy_model_forward.1} parent=1 // pred_fallthru
      _
    // Predicated region
    $region26: #{dummy_model_forward.1} parent=1 // pred_check
      _
    $region27: #{dummy_model_forward.1} parent=1 // pred_check_branch
      %203 = sbr.rel (0) target = $region29
    $region28: #{dummy_model_forward.1} parent=1 // pred_region
      %205 = dma.done [#allocation4], 128
    $region29: #{dummy_model_forward.1} parent=1 // pred_fallthru
      _
    %206 = vsyncpa [#allocation3], 1
    %207 = vsyncpa [#allocation6], 1
    %208 = vsyncpa [#allocation4], 1

</llo_original>
